<compile_context>
chip_gen: v5e
topology: v5e:2x2
jax: 0.10.0
libtpu: 0.0.40
codegen_flags: <defaults>
</compile_context>

<pallas_src>
import functools

import jax
import jax.numpy as jnp
from jax import lax
from jax.experimental import pallas as pl
from jax.experimental.pallas import tpu as pltpu


def _round_up(x, m):
    return ((x + m - 1) // m) * m


def _actor_categorical_kernel(n_actions, x_ref, w1_ref, b1_ref, w2_ref, b2_ref,
                              noise_ref, logp_ref, act_ref):
    # ---- MLP forward: bf16 MXU inputs, f32 accumulation ------------------
    x = x_ref[...]                                           # (TB, OBS_P) bf16
    h = jnp.dot(x, w1_ref[...], preferred_element_type=jnp.float32)
    h = jnp.tanh(h + b1_ref[...])                            # (TB, HID_P) f32
    logits = jnp.dot(h.astype(jnp.bfloat16), w2_ref[...],
                     preferred_element_type=jnp.float32)
    logits = logits + b2_ref[...]                            # (TB, A_P) f32

    # Work only on the real action lanes from here on (A_P -> n_actions):
    # 16x less exp/log (EUP) and cross-lane reduction (XLU) work, and no
    # padded-lane masking is needed at all.
    lg = logits[:, :n_actions]                               # (TB, A) f32

    # ---- Categorical(logits=...): normalized log-probabilities -----------
    m = jnp.max(lg, axis=-1, keepdims=True)
    z = lg - m
    lse = jnp.log(jnp.sum(jnp.exp(z), axis=-1, keepdims=True))
    logp_ref[...] = z - lse                                  # (TB, A) store

    # ---- pi.sample() via Gumbel-max (noise precomputed on host) ----------
    g = z + noise_ref[...]                                   # argmax shift-inv.
    TB = g.shape[0]
    col = lax.broadcasted_iota(jnp.int32, (TB, n_actions), 1)
    gmax = jnp.max(g, axis=-1, keepdims=True)
    idx = jnp.where(g >= gmax, col, n_actions)               # tie-break: min idx
    act_ref[...] = jnp.min(idx, axis=-1, keepdims=True).astype(jnp.int32)


def actor_categorical_forward(params, states, key, *, tb=1024):
    """Fused ActorCategorical forward pass.

    Returns:
      log_probs: (B, n_actions) float32 — normalized logits of Categorical (pi).
      actions:   (B,) int32 — sampled actions.
    """
    w1, b1, w2, b2 = params
    obs_dim, hidden = w1.shape
    n_actions = w2.shape[1]
    B = states.shape[0]

    # Padded, MXU/lane-friendly layout.
    OBS_P = _round_up(obs_dim, 16)     # bf16 sublane tile for w1
    HID_P = _round_up(hidden, 128)
    A_P = _round_up(n_actions, 128)

    # Batch tile: big enough to amortize per-step overhead, small enough to
    # leave >=2 grid steps for v7x megacore when the batch allows it.
    Bp = _round_up(B, 16)
    TB = min(int(tb), Bp)
    if Bp > 16 and Bp // TB < 2:
        TB = _round_up(pl.cdiv(Bp, 2), 16)
    B_P = _round_up(Bp, TB)

    # Pack params: zero-pad, bf16 weights (MXU inputs), f32 biases.
    w1p = jnp.zeros((OBS_P, HID_P), jnp.bfloat16)
    w1p = w1p.at[:obs_dim, :hidden].set(w1.astype(jnp.bfloat16))
    b1p = jnp.zeros((1, HID_P), jnp.float32)
    b1p = b1p.at[:, :hidden].set(b1.reshape(1, -1).astype(jnp.float32))
    w2p = jnp.zeros((HID_P, A_P), jnp.bfloat16)
    w2p = w2p.at[:hidden, :n_actions].set(w2.astype(jnp.bfloat16))
    b2p = jnp.zeros((1, A_P), jnp.float32)
    b2p = b2p.at[:, :n_actions].set(b2.reshape(1, -1).astype(jnp.float32))

    # states.float() semantics, then bf16 for the MXU (f32 accumulation).
    xp = jnp.zeros((B_P, OBS_P), jnp.bfloat16)
    xp = xp.at[:B, :obs_dim].set(states.astype(jnp.float32).astype(jnp.bfloat16))

    # Gumbel noise on the host (tiny: B_P x n_actions f32) — removes all
    # in-kernel transcendentals from the sampling tail and sidesteps the
    # hardware-PRNG primitives (which have no interpret-mode lowering).
    gnoise = jax.random.gumbel(key, (B_P, n_actions), jnp.float32)

    kernel = functools.partial(_actor_categorical_kernel, n_actions)

    log_probs, actions = pl.pallas_call(
        kernel,
        out_shape=(
            jax.ShapeDtypeStruct((B_P, n_actions), jnp.float32),   # narrow store
            jax.ShapeDtypeStruct((B_P, 1), jnp.int32),
        ),
        grid_spec=pltpu.PrefetchScalarGridSpec(
            num_scalar_prefetch=0,
            grid=(B_P // TB,),
            in_specs=[
                pl.BlockSpec((TB, OBS_P), lambda i: (i, 0)),       # states tile
                pl.BlockSpec((OBS_P, HID_P), lambda i: (0, 0)),    # W1 resident
                pl.BlockSpec((1, HID_P), lambda i: (0, 0)),        # b1 resident
                pl.BlockSpec((HID_P, A_P), lambda i: (0, 0)),      # W2 resident
                pl.BlockSpec((1, A_P), lambda i: (0, 0)),          # b2 resident
                pl.BlockSpec((TB, n_actions), lambda i: (i, 0)),   # gumbel noise
            ],
            out_specs=(
                pl.BlockSpec((TB, n_actions), lambda i: (i, 0)),   # log_probs
                pl.BlockSpec((TB, 1), lambda i: (i, 0)),           # actions
            ),
        ),
        compiler_params=pltpu.CompilerParams(
            dimension_semantics=("parallel",),      # megacore-shardable on v7x
        ),
    )(xp, w1p, b1p, w2p, b2p, gnoise)

    return log_probs[:B], actions[:B, 0]


def get_log_prob(log_probs, actions):
    """log prob of `actions` under the distribution (glue, plain JAX)."""
    return jnp.take_along_axis(log_probs, actions[:, None], axis=-1)[:, 0]


def init_params(key, obs_dim, hidden, n_actions):
    k1, k2, k3, k4 = jax.random.split(key, 4)
    w1 = jax.random.normal(k1, (obs_dim, hidden), jnp.float32) * 0.1
    b1 = jax.random.normal(k2, (1, hidden), jnp.float32) * 0.01
    w2 = jax.random.normal(k3, (hidden, n_actions), jnp.float32) * 0.1
    b2 = jax.random.normal(k4, (1, n_actions), jnp.float32) * 0.01
    return (w1, b1, w2, b2)


if __name__ == "__main__":
    key = jax.random.PRNGKey(0)
    B, OBS, HID, A = 8, 16, 32, 8

    pkey, skey, nkey = jax.random.split(key, 3)
    params = init_params(pkey, OBS, HID, A)
    states = jax.random.normal(skey, (B, OBS), jnp.float32)

    log_probs, actions = actor_categorical_forward(params, states, nkey)
    jax.block_until_ready((log_probs, actions))

    # sanity checks: valid distribution + valid sampled actions
    assert log_probs.shape == (B, A) and actions.shape == (B,)
    probs_sum = jnp.sum(jnp.exp(log_probs), axis=-1)
    assert jnp.allclose(probs_sum, 1.0, atol=1e-4), probs_sum
    assert bool(jnp.all((actions >= 0) & (actions < A)))

    # reference check of the MLP + log_softmax against plain JAX (bf16-matched)
    w1, b1, w2, b2 = params
    h_ref = jnp.tanh(states.astype(jnp.bfloat16) @ w1.astype(jnp.bfloat16)
                     + b1.astype(jnp.float32))
    lg_ref = (h_ref.astype(jnp.bfloat16) @ w2.astype(jnp.bfloat16)
              + b2.astype(jnp.float32))
    lp_ref = jax.nn.log_softmax(lg_ref, axis=-1)
    assert jnp.allclose(log_probs, lp_ref, atol=2e-2), "log_probs mismatch"

    # get_log_prob(pi, actions)
    lp = get_log_prob(log_probs, actions)
    jax.block_until_ready(lp)
    assert lp.shape == (B,)
    assert bool(jnp.all(jnp.isfinite(lp)))

    print("KERNEL_OK")
</pallas_src>

<mosaic_0001>
module attributes {stable_mosaic.version = 11 : i64} {
  func.func @_actor_categorical_kernel(%arg0: i32, %arg1: memref<16x16xbf16, #tpu.memory_space<vmem>>, %arg2: memref<16x128xbf16, #tpu.memory_space<vmem>>, %arg3: memref<1x128xf32, #tpu.memory_space<vmem>>, %arg4: memref<128x128xbf16, #tpu.memory_space<vmem>>, %arg5: memref<1x128xf32, #tpu.memory_space<vmem>>, %arg6: memref<16x8xf32, #tpu.memory_space<vmem>>, %arg7: memref<16x8xf32, #tpu.memory_space<vmem>>, %arg8: memref<16x1xi32, #tpu.memory_space<vmem>>) attributes {dimension_semantics = [#tpu.dimension_semantics<parallel>], iteration_bounds = array<i64: 1>, scalar_prefetch = 0 : i64, scratch_operands = 0 : i64, tpu.core_type = #tpu.core_type<tc>, window_params = [{transform_indices = @transform_0, window_bounds = array<i64: 16, 16>}, {pipeline_mode = #tpu.pipeline_mode<synchronous>, transform_indices = @transform_1, window_bounds = array<i64: 16, 128>}, {pipeline_mode = #tpu.pipeline_mode<synchronous>, transform_indices = @transform_2, window_bounds = array<i64: 1, 128>}, {pipeline_mode = #tpu.pipeline_mode<synchronous>, transform_indices = @transform_3, window_bounds = array<i64: 128, 128>}, {pipeline_mode = #tpu.pipeline_mode<synchronous>, transform_indices = @transform_4, window_bounds = array<i64: 1, 128>}, {transform_indices = @transform_5, window_bounds = array<i64: 16, 8>}, {transform_indices = @transform_6, window_bounds = array<i64: 16, 8>}, {transform_indices = @transform_7, window_bounds = array<i64: 16, 1>}]} {
    %c0 = arith.constant 0 : index
    %c0_0 = arith.constant 0 : index
    %0 = vector.load %arg1[%c0, %c0_0] : memref<16x16xbf16, #tpu.memory_space<vmem>>, vector<16x16xbf16>
    %c0_1 = arith.constant 0 : index
    %c0_2 = arith.constant 0 : index
    %1 = vector.load %arg2[%c0_1, %c0_2] : memref<16x128xbf16, #tpu.memory_space<vmem>>, vector<16x128xbf16>
    %cst = arith.constant dense<0.000000e+00> : vector<16x128xf32>
    %2 = tpu.matmul %0, %1, %cst {dimension_numbers = #tpu.dot_dimension_numbers<[1], [0], [0], [1], [0, 0, 1, 1], [], []>} : vector<16x16xbf16>, vector<16x128xbf16>, vector<16x128xf32> -> vector<16x128xf32>
    %c0_3 = arith.constant 0 : index
    %c0_4 = arith.constant 0 : index
    %3 = vector.load %arg3[%c0_3, %c0_4] : memref<1x128xf32, #tpu.memory_space<vmem>>, vector<1x128xf32>
    %4 = vector.broadcast %3 : vector<1x128xf32> to vector<16x128xf32>
    %5 = arith.addf %2, %4 : vector<16x128xf32>
    %6 = math.tanh %5 : vector<16x128xf32>
    %7 = arith.truncf %6 : vector<16x128xf32> to vector<16x128xbf16>
    %c0_5 = arith.constant 0 : index
    %c0_6 = arith.constant 0 : index
    %8 = vector.load %arg4[%c0_5, %c0_6] : memref<128x128xbf16, #tpu.memory_space<vmem>>, vector<128x128xbf16>
    %cst_7 = arith.constant dense<0.000000e+00> : vector<16x128xf32>
    %9 = tpu.matmul %7, %8, %cst_7 {dimension_numbers = #tpu.dot_dimension_numbers<[1], [0], [0], [1], [0, 0, 1, 1], [], []>} : vector<16x128xbf16>, vector<128x128xbf16>, vector<16x128xf32> -> vector<16x128xf32>
    %c0_8 = arith.constant 0 : index
    %c0_9 = arith.constant 0 : index
    %10 = vector.load %arg5[%c0_8, %c0_9] : memref<1x128xf32, #tpu.memory_space<vmem>>, vector<1x128xf32>
    %11 = vector.broadcast %10 : vector<1x128xf32> to vector<16x128xf32>
    %12 = arith.addf %9, %11 : vector<16x128xf32>
    %13 = vector.extract_strided_slice %12 {offsets = [0, 0], sizes = [16, 8], strides = [1, 1]} : vector<16x128xf32> to vector<16x8xf32>
    %cst_10 = arith.constant dense<0xFF800000> : vector<16xf32>
    %14 = vector.multi_reduction <maximumf>, %13, %cst_10 [1] : vector<16x8xf32> to vector<16xf32>
    %15 = vector.shape_cast %14 : vector<16xf32> to vector<16x1xf32>
    %16 = vector.broadcast %15 : vector<16x1xf32> to vector<16x8xf32>
    %17 = arith.subf %13, %16 : vector<16x8xf32>
    %18 = math.exp %17 : vector<16x8xf32>
    %cst_11 = arith.constant dense<0.000000e+00> : vector<16xf32>
    %19 = vector.multi_reduction <add>, %18, %cst_11 [1] : vector<16x8xf32> to vector<16xf32>
    %20 = vector.shape_cast %19 : vector<16xf32> to vector<16x1xf32>
    %21 = math.log %20 : vector<16x1xf32>
    %22 = vector.broadcast %21 : vector<16x1xf32> to vector<16x8xf32>
    %23 = arith.subf %17, %22 : vector<16x8xf32>
    %c0_12 = arith.constant 0 : index
    %c0_13 = arith.constant 0 : index
    %24 = vector.load %arg7[%c0_12, %c0_13] : memref<16x8xf32, #tpu.memory_space<vmem>>, vector<16x8xf32>
    tpu.vector_store %arg7[%c0_12, %c0_13], %23 {strides = array<i32>} : memref<16x8xf32, #tpu.memory_space<vmem>>, vector<16x8xf32>,
    %c0_14 = arith.constant 0 : index
    %c0_15 = arith.constant 0 : index
    %25 = vector.load %arg6[%c0_14, %c0_15] : memref<16x8xf32, #tpu.memory_space<vmem>>, vector<16x8xf32>
    %26 = arith.addf %17, %25 : vector<16x8xf32>
    %27 = tpu.iota {dimensions = array<i32: 1>} : vector<16x8xi32>
    %cst_16 = arith.constant dense<0xFF800000> : vector<16xf32>
    %28 = vector.multi_reduction <maximumf>, %26, %cst_16 [1] : vector<16x8xf32> to vector<16xf32>
    %29 = vector.shape_cast %28 : vector<16xf32> to vector<16x1xf32>
    %30 = vector.broadcast %29 : vector<16x1xf32> to vector<16x8xf32>
    %31 = arith.cmpf oge, %26, %30 : vector<16x8xf32>
    %c8_i32 = arith.constant 8 : i32
    %32 = vector.broadcast %c8_i32 : i32 to vector<16x8xi32>
    %33 = arith.select %31, %27, %32 : vector<16x8xi1>, vector<16x8xi32>
    %cst_17 = arith.constant dense<2147483647> : vector<16xi32>
    %34 = vector.multi_reduction <minsi>, %33, %cst_17 [1] : vector<16x8xi32> to vector<16xi32>
    %35 = vector.shape_cast %34 : vector<16xi32> to vector<16x1xi32>
    %c0_18 = arith.constant 0 : index
    %c0_19 = arith.constant 0 : index
    %36 = vector.load %arg8[%c0_18, %c0_19] : memref<16x1xi32, #tpu.memory_space<vmem>>, vector<16x1xi32>
    tpu.vector_store %arg8[%c0_18, %c0_19], %35 {strides = array<i32>} : memref<16x1xi32, #tpu.memory_space<vmem>>, vector<16x1xi32>,
    return
  }
  func.func @transform_0(%arg0: i32) -> (i32, i32) {
    %c0_i32 = arith.constant 0 : i32
    %c0_i32_0 = arith.constant 0 : i32
    return %arg0, %c0_i32 : i32, i32
  }
  func.func @transform_1(%arg0: i32) -> (i32, i32) {
    %c0_i32 = arith.constant 0 : i32
    %c0_i32_0 = arith.constant 0 : i32
    %c0_i32_1 = arith.constant 0 : i32
    return %c0_i32, %c0_i32_0 : i32, i32
  }
  func.func @transform_2(%arg0: i32) -> (i32, i32) {
    %c0_i32 = arith.constant 0 : i32
    %c0_i32_0 = arith.constant 0 : i32
    %c0_i32_1 = arith.constant 0 : i32
    return %c0_i32, %c0_i32_0 : i32, i32
  }
  func.func @transform_3(%arg0: i32) -> (i32, i32) {
    %c0_i32 = arith.constant 0 : i32
    %c0_i32_0 = arith.constant 0 : i32
    %c0_i32_1 = arith.constant 0 : i32
    return %c0_i32, %c0_i32_0 : i32, i32
  }
  func.func @transform_4(%arg0: i32) -> (i32, i32) {
    %c0_i32 = arith.constant 0 : i32
    %c0_i32_0 = arith.constant 0 : i32
    %c0_i32_1 = arith.constant 0 : i32
    return %c0_i32, %c0_i32_0 : i32, i32
  }
  func.func @transform_5(%arg0: i32) -> (i32, i32) {
    %c0_i32 = arith.constant 0 : i32
    %c0_i32_0 = arith.constant 0 : i32
    return %arg0, %c0_i32 : i32, i32
  }
  func.func @transform_6(%arg0: i32) -> (i32, i32) {
    %c0_i32 = arith.constant 0 : i32
    %c0_i32_0 = arith.constant 0 : i32
    return %arg0, %c0_i32 : i32, i32
  }
  func.func @transform_7(%arg0: i32) -> (i32, i32) {
    %c0_i32 = arith.constant 0 : i32
    %c0_i32_0 = arith.constant 0 : i32
    return %arg0, %c0_i32 : i32, i32
  }
}

</mosaic_0001>

<llo_original>
// kernel: tpu_custom_call.1
$region0: #{tpu_custom_call.1}
  #allocation0 [shape = 'u32[]', space=smem, size = 0x4, offset = 0x4, fixed_abs, tag = 'smem constant byte address 0x4 - core index']
  #allocation1 [shape = 'u32[72,128]{1,0:T(1,128)}', space=vmem, size = 0x9000, scoped, tag = 'internal scratch']
  %s0 = inlined_call_operand.vmem [shape: bf16[16,16], index: 0, kind: input, shape index: {}]
  %s1 = inlined_call_operand.vmem [shape: bf16[16,128], index: 1, kind: input, shape index: {}]
  %s2 = inlined_call_operand.vmem [shape: f32[1,128], index: 2, kind: input, shape index: {}]
  %s3 = inlined_call_operand.hbm [shape: bf16[128,128], index: 3, kind: input, shape index: {}]
  %s4 = inlined_call_operand.vmem [shape: f32[1,128], index: 4, kind: input, shape index: {}]
  %s5 = inlined_call_operand.vmem [shape: f32[16,8], index: 5, kind: input, shape index: {}]
  %s6 = inlined_call_operand.vmem [shape: f32[16,8], index: 6, kind: output, shape index: {0}]
  %s7 = inlined_call_operand.vmem [shape: s32[16,1], index: 7, kind: output, shape index: {1}]
  %8 = xla_tuple %s6, %s7
  %s9 = sld [smem:[#allocation0]]
  $region46: #{tpu_custom_call.1} parent=0
    _
  %s11 = ssub.s32 1, %s9
  %s12 = scalar_select 0, %s11, %s9
  $region1: #{tpu_custom_call.1} parent=0
    #allocation2 [shape = 'u8[32768]{0}', space=vmem, size = 0x8000, scoped, tag = 'input window, operand 3, single buffered']
    #allocation3 [shape = 's32[1]{0}', space=sflag, size = 0x4, scoped, tag = 'scoped memory for tpu_custom_call.1']
    %13 = vsyncpa [#allocation3], 0
    // Predicated region
    $region2: #{tpu_custom_call.1} parent=1 // pred_check
      _
    $region3: #{tpu_custom_call.1} parent=1 // pred_check_branch
      %15 = sbr.rel (0) target = $region5
    $region4: #{tpu_custom_call.1} parent=1 // pred_region
      _
    $region5: #{tpu_custom_call.1} parent=1 // pred_fallthru
      _
    // Predicated region
    $region6: #{tpu_custom_call.1} parent=1 // pred_check
      _
    $region7: #{tpu_custom_call.1} parent=1 // pred_check_branch
      %17 = sbr.rel (0) target = $region9
    $region8: #{tpu_custom_call.1} parent=1 // pred_region
      _
    $region9: #{tpu_custom_call.1} parent=1 // pred_fallthru
      _
    // Predicated region
    $region10: #{tpu_custom_call.1} parent=1 // pred_check
      _
    $region11: #{tpu_custom_call.1} parent=1 // pred_check_branch
      %19 = sbr.rel (0) target = $region13
    $region12: #{tpu_custom_call.1} parent=1 // pred_region
      _
    $region13: #{tpu_custom_call.1} parent=1 // pred_fallthru
      _
    // Predicated region
    $region14: #{tpu_custom_call.1} parent=1 // pred_check
      _
    $region15: #{tpu_custom_call.1} parent=1 // pred_check_branch
      %21 = sbr.rel (0) target = $region17
    $region16: #{tpu_custom_call.1} parent=1 // pred_region
      %23 = vsyncadd [#allocation3], 0
      %s24 = sshll.u32 %s3, 4
      %s25 = int_to_ptr.hbm [resolvable:$true] %s24
      %s26 = sshll.u32 [#allocation2], 4
      %s27 = int_to_ptr.vmem [resolvable:$true] %s26
      %32 = dma.hbm_to_vmem [thread:$0]  %s25, 1024, %s27, [#allocation3], 64, 64, 4
    $region17: #{tpu_custom_call.1} parent=1 // pred_fallthru
      _
    // Predicated region
    $region18: #{tpu_custom_call.1} parent=1 // pred_check
      _
    $region19: #{tpu_custom_call.1} parent=1 // pred_check_branch
      %34 = sbr.rel (0) target = $region21
    $region20: #{tpu_custom_call.1} parent=1 // pred_region
      _
    $region21: #{tpu_custom_call.1} parent=1 // pred_fallthru
      _
    // Predicated region
    $region22: #{tpu_custom_call.1} parent=1 // pred_check
      _
    $region23: #{tpu_custom_call.1} parent=1 // pred_check_branch
      %36 = sbr.rel (0) target = $region25
    $region24: #{tpu_custom_call.1} parent=1 // pred_region
      _
    $region25: #{tpu_custom_call.1} parent=1 // pred_fallthru
      _
    // Predicated region
    $region26: #{tpu_custom_call.1} parent=1 // pred_check
      _
    $region27: #{tpu_custom_call.1} parent=1 // pred_check_branch
      %38 = sbr.rel (0) target = $region29
    $region28: #{tpu_custom_call.1} parent=1 // pred_region
      %40 = dma.done [#allocation3], 1024
    $region29: #{tpu_custom_call.1} parent=1 // pred_fallthru
      _
    %v42 = vld [vmem:[%s0] sm:$0xf]
    %v43 = vld [vmem:[%s0 + $0x4] sm:$0xf]
    %v44 = vld [vmem:[%s1] sm:$0xf]
    %v45 = vld [vmem:[%s1 + $0x4] sm:$0xf]
    %v46 = vld [vmem:[%s2] sm:$0x1]
    %v48 = vperm.slane %v46, 0
    %v52 = vunpack.c.l.b16 %v42
    %v53 = vunpack.c.l.b16 %v43
    %v54 = vpack.c.b16 %v53, %v52
    %v57 = vunpack.c.l.b16 %v44
    %v58 = vunpack.c.l.b16 %v45
    %v59 = vpack.c.b16 %v58, %v57
    %vm61 = vcmask 130048
    %v63 = vsel %vm61, %v54, 0
    %65 = vmatpush.bf16.msra.mxu0 0
    %66 = vmatpush.bf16.msra.mxu0 0
    %67 = vmatpush.bf16.msra.mxu0 0
    %68 = vmatpush.bf16.msra.mxu0 0
    %69 = vmatpush.bf16.msra.mxu0 0
    %70 = vmatpush.bf16.msra.mxu0 0
    %71 = vmatpush.bf16.msra.mxu0 0
    %72 = vmatpush.bf16.msra.mxu0 %v59
    %73 = vmatmul.bf16.gmra.mxu0 %v63
    %v74 = vpop.f32.mrf.mxu0
    %v75 = vadd.f32 %v48, %v74
    %v76 = vpop.f32.mrf.mxu0
    %v77 = vadd.f32 %v48, %v76
    %78 = vdwg.mxu0
    %v79 = vtanh.pop %v75
    %v80 = vtanh.pop %v77
    %v81 = vpack.c.bf16 %v80, %v79
    %v82 = vld [vmem:[#allocation2] sm:$0xf]
    %v83 = vld [vmem:[#allocation2 + $0x4] sm:$0xf]
    %v84 = vld [vmem:[#allocation2 + $0x8] sm:$0xf]
    %v85 = vld [vmem:[#allocation2 + $0xc] sm:$0xf]
    %v86 = vld [vmem:[#allocation2 + $0x10] sm:$0xf]
    %v87 = vld [vmem:[#allocation2 + $0x14] sm:$0xf]
    %v88 = vld [vmem:[#allocation2 + $0x18] sm:$0xf]
    %v89 = vld [vmem:[#allocation2 + $0x1c] sm:$0xf]
    %v90 = vld [vmem:[#allocation2 + $0x20] sm:$0xf]
    %v91 = vld [vmem:[#allocation2 + $0x24] sm:$0xf]
    %v92 = vld [vmem:[#allocation2 + $0x28] sm:$0xf]
    %v93 = vld [vmem:[#allocation2 + $0x2c] sm:$0xf]
    %v94 = vld [vmem:[#allocation2 + $0x30] sm:$0xf]
    %v95 = vld [vmem:[#allocation2 + $0x34] sm:$0xf]
    %v96 = vld [vmem:[#allocation2 + $0x38] sm:$0xf]
    %v97 = vld [vmem:[#allocation2 + $0x3c] sm:$0xf]
    %v98 = vld [vmem:[%s4] sm:$0x1]
    %v100 = vperm.slane %v98, 0
    %v118 = vunpack.c.l.b16 %v82
    %v119 = vunpack.c.l.b16 %v83
    %v120 = vunpack.c.l.b16 %v84
    %v121 = vunpack.c.l.b16 %v85
    %v122 = vunpack.c.l.b16 %v86
    %v123 = vunpack.c.l.b16 %v87
    %v124 = vunpack.c.l.b16 %v88
    %v125 = vunpack.c.l.b16 %v89
    %v126 = vunpack.c.l.b16 %v90
    %v127 = vunpack.c.l.b16 %v91
    %v128 = vunpack.c.l.b16 %v92
    %v129 = vunpack.c.l.b16 %v93
    %v130 = vunpack.c.l.b16 %v94
    %v131 = vunpack.c.l.b16 %v95
    %v132 = vunpack.c.l.b16 %v96
    %v133 = vunpack.c.l.b16 %v97
    %v134 = vpack.c.b16 %v119, %v118
    %v135 = vpack.c.b16 %v121, %v120
    %v136 = vpack.c.b16 %v123, %v122
    %v137 = vpack.c.b16 %v125, %v124
    %v138 = vpack.c.b16 %v127, %v126
    %v139 = vpack.c.b16 %v129, %v128
    %v140 = vpack.c.b16 %v131, %v130
    %v141 = vpack.c.b16 %v133, %v132
    %150 = vmatpush.bf16.msra.mxu0 %v141
    %151 = vmatpush.bf16.msra.mxu0 %v140
    %152 = vmatpush.bf16.msra.mxu0 %v139
    %153 = vmatpush.bf16.msra.mxu0 %v138
    %154 = vmatpush.bf16.msra.mxu0 %v137
    %155 = vmatpush.bf16.msra.mxu0 %v136
    %156 = vmatpush.bf16.msra.mxu0 %v135
    %157 = vmatpush.bf16.msra.mxu0 %v134
    %158 = vmatmul.bf16.gmra.mxu0 %v81
    %v159 = vpop.f32.mrf.mxu0
    %v160 = vadd.f32 %v100, %v159
    %v161 = vpop.f32.mrf.mxu0
    %v162 = vadd.f32 %v100, %v161
    %163 = vdwg.mxu0
    %vm164 = vcmask 64512
    %v165 = vsel %vm164, %v160, -inf
    %166 = vmax.xlane.f32.xlu0 %v165
    %v167 = vpop.xlane.xlu0 %166
    %v168 = vsel %vm164, %v162, -inf
    %169 = vmax.xlane.f32.xlu0 %v168
    %v170 = vpop.xlane.xlu0 %169
    %v171 = vsub.f32 %v160, %v167
    %v172 = vsub.f32 %v162, %v170
    %v173 = vmul.f32 %v171, 1.442695
    %v174 = vpow.pop %v173
    %v175 = vmul.f32 %v172, 1.442695
    %v176 = vpow.pop %v175
    %v177 = vsel %vm164, %v174, 0.0
    %178 = vadd.xlane.f32.xlu0 %v177
    %v179 = vpop.xlane.xlu0 %178
    %v180 = vsel %vm164, %v176, 0.0
    %181 = vadd.xlane.f32.xlu0 %v180
    %v182 = vpop.xlane.xlu0 %181
    %v183 = vlog2.pop %v179
    %v184 = vmul.f32 %v183, 0.6931472
    %v185 = vlog2.pop %v182
    %v186 = vmul.f32 %v185, 0.6931472
    %v187 = vsub.f32 %v171, %v184
    %v188 = vsub.f32 %v172, %v186
    %189 = vst.msk [vmem:[%s6] sm:$0xff] %vm164, %v187
    %190 = vst.msk [vmem:[%s6 + $0x8] sm:$0xff] %vm164, %v188
    %v191 = vld [vmem:[%s5] sm:$0xff]
    %v192 = vld [vmem:[%s5 + $0x8] sm:$0xff]
    %v193 = vadd.f32 %v171, %v191
    %v194 = vadd.f32 %v172, %v192
    %v195 = vlaneseq
    %v196 = vand.u32 %v195, 127
    %v197 = vsel %vm164, %v193, -inf
    %198 = vmax.xlane.f32.xlu0 %v197
    %v199 = vpop.xlane.xlu0 %198
    %v200 = vsel %vm164, %v194, -inf
    %201 = vmax.xlane.f32.xlu0 %v200
    %v202 = vpop.xlane.xlu0 %201
    %vm203 = vcmp.ge.f32.partialorder %v193, %v199
    %vm204 = vcmp.ge.f32.partialorder %v194, %v202
    %v205 = vsel %vm203, %v196, 8
    %v206 = vsel %vm204, %v196, 8
    %v207 = vsel %vm164, %v205, 2147483647
    %v208 = vand.u32 %v207, 65535
    %v209 = vshra.s32 %v207, 16
    %v210 = vcvt.s32.f32 %v208
    %v211 = vcvt.s32.f32 %v209
    %212 = vmin.xlane.f32.xlu0 %v211
    %v213 = vpop.xlane.xlu0 %212
    %vm214 = vcmp.eq.f32.partialorder %v211, %v213
    %v215 = vsel %vm214, %v210, inf
    %216 = vmin.xlane.f32.xlu0 %v215
    %v217 = vpop.xlane.xlu0 %216
    %v218 = vcvt.f32.s32 %v217
    %v219 = vcvt.f32.s32 %v213
    %v220 = vshll.u32 %v219, 16
    %v221 = vadd.s32 %v220, %v218
    %v222 = vsel %vm164, %v206, 2147483647
    %v223 = vand.u32 %v222, 65535
    %v224 = vshra.s32 %v222, 16
    %v225 = vcvt.s32.f32 %v223
    %v226 = vcvt.s32.f32 %v224
    %227 = vmin.xlane.f32.xlu0 %v226
    %v228 = vpop.xlane.xlu0 %227
    %vm229 = vcmp.eq.f32.partialorder %v226, %v228
    %v230 = vsel %vm229, %v225, inf
    %231 = vmin.xlane.f32.xlu0 %v230
    %v232 = vpop.xlane.xlu0 %231
    %v233 = vcvt.f32.s32 %v232
    %v234 = vcvt.f32.s32 %v228
    %v235 = vshll.u32 %v234, 16
    %v236 = vadd.s32 %v235, %v233
    %vm237 = vcmask 7168
    %238 = vst.msk [vmem:[%s7] sm:$0xff] %vm237, %v221
    %239 = vst.msk [vmem:[%s7 + $0x8] sm:$0xff] %vm237, %v236
    // Predicated region
    $region30: #{tpu_custom_call.1} parent=1 // pred_check
      _
    $region31: #{tpu_custom_call.1} parent=1 // pred_check_branch
      %241 = sbr.rel (0) target = $region33
    $region32: #{tpu_custom_call.1} parent=1 // pred_region
      _
    $region33: #{tpu_custom_call.1} parent=1 // pred_fallthru
      _
    // Predicated region
    $region34: #{tpu_custom_call.1} parent=1 // pred_check
      _
    $region35: #{tpu_custom_call.1} parent=1 // pred_check_branch
      %243 = sbr.rel (0) target = $region37
    $region36: #{tpu_custom_call.1} parent=1 // pred_region
      _
    $region37: #{tpu_custom_call.1} parent=1 // pred_fallthru
      _
    // Predicated region
    $region38: #{tpu_custom_call.1} parent=1 // pred_check
      _
    $region39: #{tpu_custom_call.1} parent=1 // pred_check_branch
      %245 = sbr.rel (0) target = $region41
    $region40: #{tpu_custom_call.1} parent=1 // pred_region
      _
    $region41: #{tpu_custom_call.1} parent=1 // pred_fallthru
      _
    // Predicated region
    $region42: #{tpu_custom_call.1} parent=1 // pred_check
      _
    $region43: #{tpu_custom_call.1} parent=1 // pred_check_branch
      %247 = sbr.rel (0) target = $region45
    $region44: #{tpu_custom_call.1} parent=1 // pred_region
      _
    $region45: #{tpu_custom_call.1} parent=1 // pred_fallthru
      _
    %248 = vsyncpa [#allocation3], 1

</llo_original>
